<compile_context>
chip_gen: v6e
topology: v6e:2x2x1
jax: 0.10.0
libtpu: 0.0.40
codegen_flags: <defaults>
</compile_context>

<pallas_src>
import jax
import jax.numpy as jnp
from jax.experimental import pallas as pl
from jax.experimental.pallas import tpu as pltpu

_LANE = 128
_SUB = 8


def _silog_partial_kernel(p_ref, t_ref, acc_ref):
    """Accumulates per-core [sum_d, sum_d2, count] as (8,128) lane-parallel planes.

    p_ref/t_ref: (br, 128) or (br*128,) block of pred / target (native dtype).
    acc_ref:     (1, 3, 8, 128) f32 output block, resident across the reduction axis.
    """
    i = pl.program_id(1)

    @pl.when(i == 0)
    def _():
        acc_ref[...] = jnp.zeros_like(acc_ref)

    t = t_ref[...].astype(jnp.float32).reshape(-1, _SUB, _LANE)
    p = p_ref[...].astype(jnp.float32).reshape(-1, _SUB, _LANE)

    mask = t > 0.0
    mf = mask.astype(jnp.float32)
    # Guard the logs only where target <= 0 (masked out).  Where target > 0 the
    # raw pred is logged, so pred <= 0 there yields NaN exactly like the PyTorch
    # reference.  (If pred > 0 were guaranteed the p-select could be dropped; VALU
    # trim only matters on v7x.)
    d = mf * (jnp.log(jnp.where(mask, t, 1.0)) - jnp.log(jnp.where(mask, p, 1.0)))

    # In-block fold to vreg-scale accumulators: pure VPU adds, single RMW per step.
    acc_ref[0, 0] += jnp.sum(d, axis=0)
    acc_ref[0, 1] += jnp.sum(d * d, axis=0)
    acc_ref[0, 2] += jnp.sum(mf, axis=0)


def silog_loss(pred, target, lambd=0.5, block_rows=2048, num_cores=2):
    """Pallas SiLogLoss.  pred/target: same shape (e.g. NCHW).  Returns f32 scalar."""
    assert pred.shape == target.shape
    n = pred.size

    p_flat = pred.reshape(-1)
    t_flat = target.reshape(-1)

    sum_d = jnp.float32(0.0)
    sum_d2 = jnp.float32(0.0)
    cnt = jnp.float32(0.0)

    rows_total = n // _LANE
    # Block rows: multiple of 8 sublanes, no larger than the problem.
    br = (min(block_rows, rows_total) // _SUB) * _SUB
    bulk = 0

    if br >= _SUB:
        block_elems = br * _LANE
        nblocks = rows_total // br
        ncores = num_cores if nblocks >= num_cores else 1
        bpc = nblocks // ncores  # blocks per core; any leftover block goes to the tail
        bulk = ncores * bpc * block_elems

        if n % _LANE == 0:
            # Copy-free 2-D lane-dense view of the whole array.
            p_in = p_flat.reshape(rows_total, _LANE)
            t_in = t_flat.reshape(rows_total, _LANE)
            in_spec = pl.BlockSpec((br, _LANE), lambda c, i: (c * bpc + i, 0))
        else:
            # Ragged n: feed the original flat arrays (no hidden slice copy);
            # each block is a 1-D window reshaped in-kernel (lane-dense last dim).
            # TODO(synk): if the installed Mosaic rejects the in-kernel 1-D->3-D
            # reshape, fall back to the sliced 2-D view for ragged sizes.
            p_in, t_in = p_flat, t_flat
            in_spec = pl.BlockSpec((block_elems,), lambda c, i: (c * bpc + i,))

        cost = pl.CostEstimate(
            flops=10 * bulk,
            transcendentals=2 * bulk,
            bytes_accessed=(p_in.dtype.itemsize + t_in.dtype.itemsize) * bulk
            + ncores * 3 * _SUB * _LANE * 4,
        )

        parts = pl.pallas_call(
            _silog_partial_kernel,
            out_shape=jax.ShapeDtypeStruct((ncores, 3, _SUB, _LANE), jnp.float32),
            grid=(ncores, bpc),
            in_specs=[in_spec, in_spec],
            out_specs=pl.BlockSpec((1, 3, _SUB, _LANE), lambda c, i: (c, 0, 0, 0)),
            compiler_params=pltpu.CompilerParams(
                dimension_semantics=("parallel", "arbitrary"),
                vmem_limit_bytes=32 * 1024 * 1024,
            ),
            cost_estimate=cost,
        )(p_in, t_in)

        sum_d = jnp.sum(parts[:, 0])
        sum_d2 = jnp.sum(parts[:, 1])
        cnt = jnp.sum(parts[:, 2])

    if bulk < n:
        # Remainder (< one full block per core, plus any ragged <128 tail):
        # one small fused JAX pass.
        pt = p_flat[bulk:].astype(jnp.float32)
        tt = t_flat[bulk:].astype(jnp.float32)
        m = tt > 0.0
        dt = jnp.where(
            m, jnp.log(jnp.where(m, tt, 1.0)) - jnp.log(jnp.where(m, pt, 1.0)), 0.0
        )
        sum_d = sum_d + jnp.sum(dt)
        sum_d2 = sum_d2 + jnp.sum(dt * dt)
        cnt = cnt + jnp.sum(m.astype(jnp.float32))

    # Finalize.  Dividing by the raw count reproduces the PyTorch semantics
    # (NaN if no target > 0).  The clamp only absorbs f32 rounding: the argument
    # is mathematically >= 0 for lambd <= 1.
    mean_d = sum_d / cnt
    mean_d2 = sum_d2 / cnt
    return jnp.sqrt(jnp.maximum(mean_d2 - lambd * mean_d * mean_d, 0.0))


def _silog_ref(pred, target, lambd=0.5):
    mask = target > 0
    d = jnp.where(
        mask,
        jnp.log(jnp.where(mask, target, 1.0)) - jnp.log(jnp.where(mask, pred, 1.0)),
        0.0,
    )
    nvalid = jnp.sum(mask)
    mean_d = jnp.sum(d) / nvalid
    mean_d2 = jnp.sum(d * d) / nvalid
    return jnp.sqrt(jnp.maximum(mean_d2 - lambd * mean_d * mean_d, 0.0))


if __name__ == "__main__":
    key = jax.random.PRNGKey(0)
    k1, k2, k3 = jax.random.split(key, 3)

    B, C, H, W = 2, 4, 16, 16
    # Positive predictions; targets positive but with some invalid (<=0) entries.
    pred = jax.random.uniform(k1, (B, C, H, W), jnp.float32, minval=0.1, maxval=10.0)
    target = jax.random.uniform(k2, (B, C, H, W), jnp.float32, minval=0.1, maxval=10.0)
    invalid = jax.random.bernoulli(k3, 0.3, (B, C, H, W))
    target = jnp.where(invalid, 0.0, target)  # masked-out pixels

    # block_rows=8 at this small size -> grid (2, 1): exercises the two-core
    # parallel axis and the per-core output blocks (sequential on single-TC chips).
    loss = jax.block_until_ready(silog_loss(pred, target, lambd=0.5, block_rows=8))
    ref = _silog_ref(pred, target, lambd=0.5)

    assert jnp.isfinite(loss), "loss is not finite"
    assert jnp.allclose(loss, ref, rtol=1e-5, atol=1e-6), (loss, ref)
    print("KERNEL_OK")
</pallas_src>

<mosaic_0001>
module attributes {stable_mosaic.version = 11 : i64} {
  func.func @_silog_partial_kernel(%arg0: i32, %arg1: i32, %arg2: memref<8x128xf32, #tpu.memory_space<vmem>>, %arg3: memref<8x128xf32, #tpu.memory_space<vmem>>, %arg4: memref<1x3x8x128xf32, #tpu.memory_space<vmem>>) attributes {dimension_semantics = [#tpu.dimension_semantics<parallel>, #tpu.dimension_semantics<arbitrary>], iteration_bounds = array<i64: 2, 1>, scalar_prefetch = 0 : i64, scratch_operands = 0 : i64, tpu.core_type = #tpu.core_type<tc>, window_params = [{transform_indices = @transform_0, window_bounds = array<i64: 8, 128>}, {transform_indices = @transform_1, window_bounds = array<i64: 8, 128>}, {transform_indices = @transform_2, window_bounds = array<i64: 1, 3, 8, 128>}]} {
    %c0_i32 = arith.constant 0 : i32
    %0 = arith.cmpi eq, %arg1, %c0_i32 : i32
    %1 = arith.extui %0 : i1 to i32
    %c0_i32_0 = arith.constant 0 : i32
    %2 = arith.cmpi ne, %1, %c0_i32_0 : i32
    scf.if %2 {
      %cst_31 = arith.constant 0.000000e+00 : f32
      %41 = vector.broadcast %cst_31 : f32 to vector<1x3x8x128xf32>
      %c0_32 = arith.constant 0 : index
      %c0_33 = arith.constant 0 : index
      %c0_34 = arith.constant 0 : index
      %c0_35 = arith.constant 0 : index
      %42 = vector.load %arg4[%c0_32, %c0_33, %c0_34, %c0_35] : memref<1x3x8x128xf32, #tpu.memory_space<vmem>>, vector<1x3x8x128xf32>
      tpu.vector_store %arg4[%c0_32, %c0_33, %c0_34, %c0_35], %41 {strides = array<i32>} : memref<1x3x8x128xf32, #tpu.memory_space<vmem>>, vector<1x3x8x128xf32>,
    } else {
    }
    %c0 = arith.constant 0 : index
    %c0_1 = arith.constant 0 : index
    %3 = vector.load %arg3[%c0, %c0_1] : memref<8x128xf32, #tpu.memory_space<vmem>>, vector<8x128xf32>
    %4 = vector.shape_cast %3 : vector<8x128xf32> to vector<1x8x128xf32>
    %c0_2 = arith.constant 0 : index
    %c0_3 = arith.constant 0 : index
    %5 = vector.load %arg2[%c0_2, %c0_3] : memref<8x128xf32, #tpu.memory_space<vmem>>, vector<8x128xf32>
    %6 = vector.shape_cast %5 : vector<8x128xf32> to vector<1x8x128xf32>
    %cst = arith.constant 0.000000e+00 : f32
    %7 = vector.broadcast %cst : f32 to vector<1x8x128xf32>
    %8 = arith.cmpf ogt, %4, %7 : vector<1x8x128xf32>
    %9 = arith.extui %8 : vector<1x8x128xi1> to vector<1x8x128xi32>
    %10 = arith.sitofp %9 : vector<1x8x128xi32> to vector<1x8x128xf32>
    %cst_4 = arith.constant 1.000000e+00 : f32
    %11 = vector.broadcast %cst_4 : f32 to vector<1x8x128xf32>
    %12 = arith.select %8, %4, %11 : vector<1x8x128xi1>, vector<1x8x128xf32>
    %13 = math.log %12 : vector<1x8x128xf32>
    %cst_5 = arith.constant 1.000000e+00 : f32
    %14 = vector.broadcast %cst_5 : f32 to vector<1x8x128xf32>
    %15 = arith.select %8, %6, %14 : vector<1x8x128xi1>, vector<1x8x128xf32>
    %16 = math.log %15 : vector<1x8x128xf32>
    %17 = arith.subf %13, %16 : vector<1x8x128xf32>
    %18 = arith.mulf %10, %17 : vector<1x8x128xf32>
    %c0_6 = arith.constant 0 : index
    %c0_7 = arith.constant 0 : index
    %c0_8 = arith.constant 0 : index
    %c0_9 = arith.constant 0 : index
    %19 = vector.load %arg4[%c0_6, %c0_7, %c0_8, %c0_9] : memref<1x3x8x128xf32, #tpu.memory_space<vmem>>, vector<1x1x8x128xf32>
    %20 = vector.shape_cast %19 : vector<1x1x8x128xf32> to vector<8x128xf32>
    %cst_10 = arith.constant dense<0.000000e+00> : vector<8x128xf32>
    %21 = vector.multi_reduction <add>, %18, %cst_10 [0] : vector<1x8x128xf32> to vector<8x128xf32>
    %22 = arith.addf %20, %21 : vector<8x128xf32>
    %c0_11 = arith.constant 0 : index
    %c0_12 = arith.constant 0 : index
    %c0_13 = arith.constant 0 : index
    %c0_14 = arith.constant 0 : index
    %23 = vector.load %arg4[%c0_11, %c0_12, %c0_13, %c0_14] : memref<1x3x8x128xf32, #tpu.memory_space<vmem>>, vector<1x1x8x128xf32>
    %24 = vector.shape_cast %23 : vector<1x1x8x128xf32> to vector<8x128xf32>
    %25 = vector.shape_cast %22 : vector<8x128xf32> to vector<1x1x8x128xf32>
    tpu.vector_store %arg4[%c0_11, %c0_12, %c0_13, %c0_14], %25 {strides = array<i32>} : memref<1x3x8x128xf32, #tpu.memory_space<vmem>>, vector<1x1x8x128xf32>,
    %c0_15 = arith.constant 0 : index
    %c1 = arith.constant 1 : index
    %c0_16 = arith.constant 0 : index
    %c0_17 = arith.constant 0 : index
    %26 = vector.load %arg4[%c0_15, %c1, %c0_16, %c0_17] : memref<1x3x8x128xf32, #tpu.memory_space<vmem>>, vector<1x1x8x128xf32>
    %27 = vector.shape_cast %26 : vector<1x1x8x128xf32> to vector<8x128xf32>
    %28 = arith.mulf %18, %18 : vector<1x8x128xf32>
    %cst_18 = arith.constant dense<0.000000e+00> : vector<8x128xf32>
    %29 = vector.multi_reduction <add>, %28, %cst_18 [0] : vector<1x8x128xf32> to vector<8x128xf32>
    %30 = arith.addf %27, %29 : vector<8x128xf32>
    %c0_19 = arith.constant 0 : index
    %c1_20 = arith.constant 1 : index
    %c0_21 = arith.constant 0 : index
    %c0_22 = arith.constant 0 : index
    %31 = vector.load %arg4[%c0_19, %c1_20, %c0_21, %c0_22] : memref<1x3x8x128xf32, #tpu.memory_space<vmem>>, vector<1x1x8x128xf32>
    %32 = vector.shape_cast %31 : vector<1x1x8x128xf32> to vector<8x128xf32>
    %33 = vector.shape_cast %30 : vector<8x128xf32> to vector<1x1x8x128xf32>
    tpu.vector_store %arg4[%c0_19, %c1_20, %c0_21, %c0_22], %33 {strides = array<i32>} : memref<1x3x8x128xf32, #tpu.memory_space<vmem>>, vector<1x1x8x128xf32>,
    %c0_23 = arith.constant 0 : index
    %c2 = arith.constant 2 : index
    %c0_24 = arith.constant 0 : index
    %c0_25 = arith.constant 0 : index
    %34 = vector.load %arg4[%c0_23, %c2, %c0_24, %c0_25] : memref<1x3x8x128xf32, #tpu.memory_space<vmem>>, vector<1x1x8x128xf32>
    %35 = vector.shape_cast %34 : vector<1x1x8x128xf32> to vector<8x128xf32>
    %cst_26 = arith.constant dense<0.000000e+00> : vector<8x128xf32>
    %36 = vector.multi_reduction <add>, %10, %cst_26 [0] : vector<1x8x128xf32> to vector<8x128xf32>
    %37 = arith.addf %35, %36 : vector<8x128xf32>
    %c0_27 = arith.constant 0 : index
    %c2_28 = arith.constant 2 : index
    %c0_29 = arith.constant 0 : index
    %c0_30 = arith.constant 0 : index
    %38 = vector.load %arg4[%c0_27, %c2_28, %c0_29, %c0_30] : memref<1x3x8x128xf32, #tpu.memory_space<vmem>>, vector<1x1x8x128xf32>
    %39 = vector.shape_cast %38 : vector<1x1x8x128xf32> to vector<8x128xf32>
    %40 = vector.shape_cast %37 : vector<8x128xf32> to vector<1x1x8x128xf32>
    tpu.vector_store %arg4[%c0_27, %c2_28, %c0_29, %c0_30], %40 {strides = array<i32>} : memref<1x3x8x128xf32, #tpu.memory_space<vmem>>, vector<1x1x8x128xf32>,
    return
  }
  func.func @transform_0(%arg0: i32, %arg1: i32) -> (i32, i32) {
    %c1_i32 = arith.constant 1 : i32
    %0 = arith.muli %arg0, %c1_i32 : i32
    %1 = arith.addi %0, %arg1 : i32
    %c0_i32 = arith.constant 0 : i32
    %c0_i32_0 = arith.constant 0 : i32
    return %1, %c0_i32 : i32, i32
  }
  func.func @transform_1(%arg0: i32, %arg1: i32) -> (i32, i32) {
    %c1_i32 = arith.constant 1 : i32
    %0 = arith.muli %arg0, %c1_i32 : i32
    %1 = arith.addi %0, %arg1 : i32
    %c0_i32 = arith.constant 0 : i32
    %c0_i32_0 = arith.constant 0 : i32
    return %1, %c0_i32 : i32, i32
  }
  func.func @transform_2(%arg0: i32, %arg1: i32) -> (i32, i32, i32, i32) {
    %c0_i32 = arith.constant 0 : i32
    %c0_i32_0 = arith.constant 0 : i32
    %c0_i32_1 = arith.constant 0 : i32
    %c0_i32_2 = arith.constant 0 : i32
    return %arg0, %c0_i32, %c0_i32_0, %c0_i32_1 : i32, i32, i32, i32
  }
}

</mosaic_0001>

<llo_original>
// kernel: tpu_custom_call.1
$region0: #{tpu_custom_call.1}
  #allocation0 [shape = 'u32[]', space=smem, size = 0x4, offset = 0x4, fixed_abs, tag = 'smem constant byte address 0x4 - core index']
  #allocation1 [shape = 'u32[144,128]{1,0:T(1,128)}', space=vmem, size = 0x12000, scoped, tag = 'internal scratch']
  %s0 = inlined_call_operand.hbm [shape: f32[16,128], index: 0, kind: input, shape index: {}]
  %s1 = inlined_call_operand.hbm [shape: f32[16,128], index: 1, kind: input, shape index: {}]
  %s2 = inlined_call_operand.hbm [shape: f32[2,3,8,128], index: 2, kind: output, shape index: {}]
  %s3 = sld [smem:[#allocation0]]
  $region53: #{tpu_custom_call.1} parent=0
    _
  %s5 = ssub.s32 1, %s3
  %s6 = scalar_select 0, %s5, %s3
  $region1: #{tpu_custom_call.1} parent=0
    #allocation2 [shape = 'u8[8192]{0}', space=vmem, size = 0x2000, scoped, tag = 'input window, operand 0']
    #allocation3 [shape = 's32[2]{0}', space=sflag, size = 0x8, scoped, tag = 'scoped memory for tpu_custom_call.1']
    #allocation4 [shape = 's32[2]{0}', space=sflag, size = 0x8, scoped, tag = 'scoped memory for tpu_custom_call.1']
    #allocation5 [shape = 'u8[8192]{0}', space=vmem, size = 0x2000, scoped, tag = 'input window, operand 1']
    #allocation6 [shape = 's32[2]{0}', space=sflag, size = 0x8, scoped, tag = 'scoped memory for tpu_custom_call.1']
    #allocation7 [shape = 'u8[24576]{0}', space=vmem, size = 0x6000, scoped, tag = 'output window, operand 0']
    %7 = vsyncpa [#allocation3], 0
    %s8 = scalar_lea.sflag [#allocation3], 1
    %9 = vsyncpa %s8, 0
    %10 = vsyncpa [#allocation6], 0
    %s11 = scalar_lea.sflag [#allocation6], 1
    %12 = vsyncpa %s11, 0
    %13 = vsyncpa [#allocation4], 0
    %s14 = scalar_lea.sflag [#allocation4], 1
    %15 = vsyncpa %s14, 0
    loop: start=0, step=1, limit=4
    $region2: #{tpu_custom_call.1} parent=1 // loop_pre_header
      _
    $region3: #{tpu_custom_call.1} parent=1 // loop_header
      %s17 = sphi 0, %s21
      %p18 = scmp.ge.s32.totalorder %s17, 4
      %s24 = sphi 0, %s36
      %s25 = sphi 0, %s32
      %s26 = sphi 0, %s24
      %s27 = sphi 0, %s25
      %s28 = sphi 0, %s26
      %s29 = sphi 0, %s27
      %s41 = sphi 0, %s43
      %s44 = sphi 0, %s41
      %s45 = sphi 0, %s44
      %s61 = sphi 0, %s45
      %s69 = sphi 0, %s71
      %s72 = sphi 0, %s69
      %s73 = sphi 0, %s72
      %s89 = sphi 0, %s73
      %s95 = sphi 0, %s97
      %s98 = sphi 0, %s95
      %s99 = sphi 0, %s98
      %s115 = sphi 0, %s99
    $region4: #{tpu_custom_call.1} parent=1 // loop_header_branch
      %20 = sbr.rel (%p18) target = $region8
    $region5: #{tpu_custom_call.1} parent=1 // loop_body
      %s22 = ssub.s32 %s17, 1
      %s23 = ssub.s32 %s17, 2
      %s30 = sadd.s32 1, %s25
      %p31 = scmp.ge.s32.totalorder %s30, 1
      %s32 = scalar_select %p31, 0, %s30
      %s33 = sadd.s32 1, %s24
      %s34 = scalar_select %p31, %s33, %s24
      %p35 = scmp.ge.s32.totalorder %s34, 2
      %s36 = scalar_select %p35, 0, %s34
      %s37 = sadd.s32 %s24, %s25
      %s38 = sadd.s32 %s36, %s32
      %s39 = ssub.s32 %s37, %s38
      %p40 = scmp.eq.s32.totalorder %s39, 0
      %s42 = sadd.s32 %s41, 1
      %s43 = scalar_select %p40, %s41, %s42
      %p46 = pneg %p40
      %p47 = scmp.eq.s32.totalorder %s17, 1
      %p48 = por %p46, %p47
      %p49 = scmp.ne.s32.totalorder %s41, %s44
      %p50 = scmp.eq.s32.totalorder %s17, 0
      %p51 = por %p49, %p50
      %p52 = scmp.ne.s32.totalorder %s41, %s44
      %p53 = scmp.eq.s32.totalorder %s22, 1
      %p54 = por %p52, %p53
      %p55 = scmp.ne.s32.totalorder %s44, %s45
      %p56 = scmp.eq.s32.totalorder %s22, 0
      %p57 = por %p55, %p56
      %p58 = scmp.ne.s32.totalorder %s44, %s45
      %p59 = scmp.eq.s32.totalorder %s23, 1
      %p60 = por %p58, %p59
      %p62 = scmp.ne.s32.totalorder %s45, %s61
      %p63 = scmp.eq.s32.totalorder %s23, 0
      %p64 = por %p62, %p63
      %s65 = sadd.s32 %s24, %s25
      %s66 = sadd.s32 %s36, %s32
      %s67 = ssub.s32 %s65, %s66
      %p68 = scmp.eq.s32.totalorder %s67, 0
      %s70 = sadd.s32 %s69, 1
      %s71 = scalar_select %p68, %s69, %s70
      %p74 = pneg %p68
      %p75 = scmp.eq.s32.totalorder %s17, 1
      %p76 = por %p74, %p75
      %p77 = scmp.ne.s32.totalorder %s69, %s72
      %p78 = scmp.eq.s32.totalorder %s17, 0
      %p79 = por %p77, %p78
      %p80 = scmp.ne.s32.totalorder %s69, %s72
      %p81 = scmp.eq.s32.totalorder %s22, 1
      %p82 = por %p80, %p81
      %p83 = scmp.ne.s32.totalorder %s72, %s73
      %p84 = scmp.eq.s32.totalorder %s22, 0
      %p85 = por %p83, %p84
      %p86 = scmp.ne.s32.totalorder %s72, %s73
      %p87 = scmp.eq.s32.totalorder %s23, 1
      %p88 = por %p86, %p87
      %p90 = scmp.ne.s32.totalorder %s73, %s89
      %p91 = scmp.eq.s32.totalorder %s23, 0
      %p92 = por %p90, %p91
      %s93 = ssub.s32 %s24, %s36
      %p94 = scmp.eq.s32.totalorder %s93, 0
      %s96 = sadd.s32 %s95, 1
      %s97 = scalar_select %p94, %s95, %s96
      %p100 = pneg %p94
      %p101 = scmp.eq.s32.totalorder %s17, 1
      %p102 = por %p100, %p101
      %p103 = scmp.ne.s32.totalorder %s95, %s98
      %p104 = scmp.eq.s32.totalorder %s17, 0
      %p105 = por %p103, %p104
      %p106 = scmp.ne.s32.totalorder %s95, %s98
      %p107 = scmp.eq.s32.totalorder %s22, 1
      %p108 = por %p106, %p107
      %p109 = scmp.ne.s32.totalorder %s98, %s99
      %p110 = scmp.eq.s32.totalorder %s22, 0
      %p111 = por %p109, %p110
      %p112 = scmp.ne.s32.totalorder %s98, %s99
      %p113 = scmp.eq.s32.totalorder %s23, 1
      %p114 = por %p112, %p113
      %p116 = scmp.ne.s32.totalorder %s99, %s115
      %p117 = scmp.eq.s32.totalorder %s23, 0
      %p118 = por %p116, %p117
      %p119 = scmp.le.s32.totalorder 1, %s17
      %p120 = scmp.lt.s32.totalorder %s17, 3
      %p121 = pnand %p119, %p120
      %p122 = pneg %p121
      // Predicated region
      $region9: #{tpu_custom_call.1} parent=5 // pred_check
        _
      $region10: #{tpu_custom_call.1} parent=5 // pred_check_branch
        %124 = sbr.rel (%p121) target = $region12
      $region11: #{tpu_custom_call.1} parent=5 // pred_region
        %s125 = ssub.s32 %s17, 1
      $region12: #{tpu_custom_call.1} parent=5 // pred_fallthru
        _
      %p126 = scmp.lt.s32.totalorder %s17, 2
      // Predicated region
      $region13: #{tpu_custom_call.1} parent=5 // pred_check
        %p127 = pneg %p126
      $region14: #{tpu_custom_call.1} parent=5 // pred_check_branch
        %129 = sbr.rel (%p127) target = $region16
      $region15: #{tpu_custom_call.1} parent=5 // pred_region
        // Predicated region
        $region17: #{tpu_custom_call.1} parent=15 // pred_check
          %p130 = pneg %p51
        $region18: #{tpu_custom_call.1} parent=15 // pred_check_branch
          %132 = sbr.rel (%p130) target = $region20
        $region19: #{tpu_custom_call.1} parent=15 // pred_region
          %s133 = sand.u32 %s41, 1
          %s134 = scalar_lea.sflag [#allocation3], %s133
          %s135 = sand.u32 %s41, 1
          %s136 = smul.addr %s135, 8
          %s137 = scalar_lea.vmem [#allocation2], %s136
          %s138 = sadd.s32 %s24, %s25
          %s140 = ssub.s32 128, 128
          %141 = vsyncadd %s134, %s140
          %s142 = smul.addr %s138, 128
          %s143 = scalar_lea.hbm %s0, %s142
          %s145 = sshll.u32 %s137, 4
          %s146 = int_to_ptr.vmem [resolvable:$true] %s145
          %148 = dma.hbm_to_vmem [thread:$0]  %s143, 128, %s146, %s134
        $region20: #{tpu_custom_call.1} parent=15 // pred_fallthru
          _
        // Predicated region
        $region21: #{tpu_custom_call.1} parent=15 // pred_check
          %p149 = pneg %p79
        $region22: #{tpu_custom_call.1} parent=15 // pred_check_branch
          %151 = sbr.rel (%p149) target = $region24
        $region23: #{tpu_custom_call.1} parent=15 // pred_region
          %s152 = sand.u32 %s69, 1
          %s153 = scalar_lea.sflag [#allocation6], %s152
          %s154 = sand.u32 %s69, 1
          %s155 = smul.addr %s154, 8
          %s156 = scalar_lea.vmem [#allocation5], %s155
          %s157 = sadd.s32 %s24, %s25
          %s159 = ssub.s32 128, 128
          %160 = vsyncadd %s153, %s159
          %s161 = smul.addr %s157, 128
          %s162 = scalar_lea.hbm %s1, %s161
          %s164 = sshll.u32 %s156, 4
          %s165 = int_to_ptr.vmem [resolvable:$true] %s164
          %167 = dma.hbm_to_vmem [thread:$0]  %s162, 128, %s165, %s153
        $region24: #{tpu_custom_call.1} parent=15 // pred_fallthru
          _
      $region16: #{tpu_custom_call.1} parent=5 // pred_fallthru
        _
      %p168 = scmp.le.s32.totalorder 1, %s17
      %p169 = scmp.lt.s32.totalorder %s17, 3
      %p170 = pnand %p168, %p169
      %p171 = pneg %p170
      // Predicated region
      $region25: #{tpu_custom_call.1} parent=5 // pred_check
        _
      $region26: #{tpu_custom_call.1} parent=5 // pred_check_branch
        %173 = sbr.rel (%p170) target = $region28
      $region27: #{tpu_custom_call.1} parent=5 // pred_region
        %s174 = ssub.s32 %s17, 1
        %s175 = sand.u32 %s44, 1
        %s176 = scalar_lea.sflag [#allocation3], %s175
        %s177 = sand.u32 %s44, 1
        %s178 = smul.addr %s177, 8
        %s179 = scalar_lea.vmem [#allocation2], %s178
        // Predicated region
        $region29: #{tpu_custom_call.1} parent=27 // pred_check
          %p180 = pneg %p57
        $region30: #{tpu_custom_call.1} parent=27 // pred_check_branch
          %182 = sbr.rel (%p180) target = $region32
        $region31: #{tpu_custom_call.1} parent=27 // pred_region
          %183 = dma.done %s176, 128
        $region32: #{tpu_custom_call.1} parent=27 // pred_fallthru
          _
        %s184 = sand.u32 %s72, 1
        %s185 = scalar_lea.sflag [#allocation6], %s184
        %s186 = sand.u32 %s72, 1
        %s187 = smul.addr %s186, 8
        %s188 = scalar_lea.vmem [#allocation5], %s187
        // Predicated region
        $region33: #{tpu_custom_call.1} parent=27 // pred_check
          %p189 = pneg %p85
        $region34: #{tpu_custom_call.1} parent=27 // pred_check_branch
          %191 = sbr.rel (%p189) target = $region36
        $region35: #{tpu_custom_call.1} parent=27 // pred_region
          %192 = dma.done %s185, 128
        $region36: #{tpu_custom_call.1} parent=27 // pred_fallthru
          _
        %s193 = sand.u32 %s44, 1
        %s194 = scalar_lea.sflag [#allocation3], %s193
        %s195 = sand.u32 %s44, 1
        %s196 = smul.addr %s195, 8
        %s197 = scalar_lea.vmem [#allocation2], %s196
        %p198 = pneg %p57
        %p199 = pneg %p54
        %s200 = sand.u32 %s72, 1
        %s201 = scalar_lea.sflag [#allocation6], %s200
        %s202 = sand.u32 %s72, 1
        %s203 = smul.addr %s202, 8
        %s204 = scalar_lea.vmem [#allocation5], %s203
        %p205 = pneg %p85
        %p206 = pneg %p82
        %p207 = pneg %p111
        %p208 = pneg %p108
        %s209 = sand.u32 %s98, 1
        %s210 = scalar_lea.sflag [#allocation4], %s209
        %s211 = sand.u32 %s98, 1
        %s212 = smul.addr %s211, 24
        %s213 = scalar_lea.vmem [#allocation7], %s212
        %s214 = sadd.s32 %s26, %s27
        %s215 = sadd.s32 %s26, %s27
        %p216 = scmp.eq.s32.totalorder %s27, 0
        // Predicated region
        $region37: #{tpu_custom_call.1} parent=27 // pred_check
          %p217 = pneg %p216
        $region38: #{tpu_custom_call.1} parent=27 // pred_check_branch
          %219 = sbr.rel (%p217) target = $region40
        $region39: #{tpu_custom_call.1} parent=27 // pred_region
          %220 = vst [vmem:[%s213] sm:$0xff] 0.0
          %221 = vst [vmem:[%s213 + $0x8] sm:$0xff] 0.0
          %222 = vst [vmem:[%s213 + $0x10] sm:$0xff] 0.0
        $region40: #{tpu_custom_call.1} parent=27 // pred_fallthru
          _
        %v223 = vld [vmem:[%s188] sm:$0xff]
        %v224 = vld [vmem:[%s179] sm:$0xff]
        %vm225 = vcmp.gt.f32.partialorder %v223, 0.0
        %v226 = vsel %vm225, 1, 0
        %v227 = vcvt.s32.f32 %v226
        %v228 = vsel %vm225, %v223, 1.0
        %v229 = vlog2.pop %v228
        %v230 = vmul.f32 %v229, 0.6931472
        %v231 = vsel %vm225, %v224, 1.0
        %v232 = vlog2.pop %v231
        %v233 = vmul.f32 %v232, 0.6931472
        %v234 = vsub.f32 %v230, %v233
        %v235 = vmul.f32 %v227, %v234
        %v236 = vld [vmem:[%s213] sm:$0xff]
        %v237 = vadd.f32 %v235, 0.0
        %v238 = vadd.f32 %v236, %v237
        %239 = vst [vmem:[%s213] sm:$0xff] %v238
        %s240 = scalar_lea.vmem %s213, 8 [#allocation7]
        %v241 = vld [vmem:[%s240] sm:$0xff]
        %v242 = vmul.f32 %v235, %v235
        %v243 = vadd.f32 %v242, 0.0
        %v244 = vadd.f32 %v241, %v243
        %245 = vst [vmem:[%s240] sm:$0xff] %v244
        %s246 = scalar_lea.vmem %s213, 16 [#allocation7]
        %v247 = vld [vmem:[%s246] sm:$0xff]
        %v248 = vadd.f32 %v227, 0.0
        %v249 = vadd.f32 %v247, %v248
        %250 = vst [vmem:[%s246] sm:$0xff] %v249
        %s251 = sand.u32 %s98, 1
        %s252 = scalar_lea.sflag [#allocation4], %s251
        %s253 = sand.u32 %s98, 1
        %s254 = smul.addr %s253, 24
        %s255 = scalar_lea.vmem [#allocation7], %s254
        // Predicated region
        $region41: #{tpu_custom_call.1} parent=27 // pred_check
          %p256 = pneg %p108
        $region42: #{tpu_custom_call.1} parent=27 // pred_check_branch
          %258 = sbr.rel (%p256) target = $region44
        $region43: #{tpu_custom_call.1} parent=27 // pred_region
          %s260 = ssub.s32 384, 384
          %261 = vsyncadd %s252, %s260
          %s262 = smul.addr %s26, 3
          %s263 = smul.addr %s262, 128
          %s264 = scalar_lea.hbm %s2, %s263
          %s265 = sshll.u32 %s255, 4
          %s266 = int_to_ptr.vmem [resolvable:$true] %s265
          %271 = dma.vmem_to_hbm [thread:$0]  %s266, 384, %s264, %s252, 128, 128, 8
        $region44: #{tpu_custom_call.1} parent=27 // pred_fallthru
          _
      $region28: #{tpu_custom_call.1} parent=5 // pred_fallthru
        _
      %p272 = scmp.le.s32.totalorder 2, %s17
      // Predicated region
      $region45: #{tpu_custom_call.1} parent=5 // pred_check
        %p273 = pneg %p272
      $region46: #{tpu_custom_call.1} parent=5 // pred_check_branch
        %275 = sbr.rel (%p273) target = $region48
      $region47: #{tpu_custom_call.1} parent=5 // pred_region
        %s276 = ssub.s32 %s17, 2
        // Predicated region
        $region49: #{tpu_custom_call.1} parent=47 // pred_check
          %p277 = pneg %p114
        $region50: #{tpu_custom_call.1} parent=47 // pred_check_branch
          %279 = sbr.rel (%p277) target = $region52
        $region51: #{tpu_custom_call.1} parent=47 // pred_region
          %s280 = sand.u32 %s99, 1
          %s281 = scalar_lea.sflag [#allocation4], %s280
          %s282 = sand.u32 %s99, 1
          %s283 = smul.addr %s282, 24
          %s284 = scalar_lea.vmem [#allocation7], %s283
          %285 = dma.done %s281, 384
        $region52: #{tpu_custom_call.1} parent=47 // pred_fallthru
          _
      $region48: #{tpu_custom_call.1} parent=5 // pred_fallthru
        _
    $region6: #{tpu_custom_call.1} parent=1 // loop_footer
      %s21 = sadd.s32 1, %s17
    $region7: #{tpu_custom_call.1} parent=1 // loop_footer_branch
      %16 = sbr.rel target = $region3
    $region8: #{tpu_custom_call.1} parent=1 // loop_exit
      _
    %286 = vsyncpa [#allocation3], 1
    %s287 = scalar_lea.sflag [#allocation3], 1
    %288 = vsyncpa %s287, 1
    %289 = vsyncpa [#allocation6], 1
    %s290 = scalar_lea.sflag [#allocation6], 1
    %291 = vsyncpa %s290, 1
    %292 = vsyncpa [#allocation4], 1
    %s293 = scalar_lea.sflag [#allocation4], 1
    %294 = vsyncpa %s293, 1

</llo_original>
